<compile_context>
chip_gen: v5e
topology: v5e:2x2
jax: 0.10.0
libtpu: 0.0.40
codegen_flags: <defaults>
</compile_context>

<pallas_src>
import math
import functools

import numpy as np
import jax
import jax.numpy as jnp
from jax.experimental import pallas as pl
from jax.experimental.pallas import tpu as pltpu


def _pool_matrix(H, W, patch_size):
    """(HW, HW) stencil P with P[s, t] = 1/p^2 if input pixel s lies inside the
    patch window of output pixel t (zero padding, count_include_pad)."""
    HW = H * W
    pad = (patch_size - 1) // 2
    hh, ww = np.divmod(np.arange(HW), W)
    d_h = hh[:, None] - hh[None, :]          # h_s - h_t
    d_w = ww[:, None] - ww[None, :]          # w_s - w_t
    in_win = ((d_h >= -pad) & (d_h <= patch_size - 1 - pad) &
              (d_w >= -pad) & (d_w <= patch_size - 1 - pad))
    return jnp.asarray(in_win.astype(np.float32) / float(patch_size * patch_size))


def _aggr_kernel(x_ref, p_ref, w_ref, b_ref, o_ref, *, B, C, HW):
    # x_ref: (B*C, HW)  channel-major raw view of the features (f32)
    # p_ref: (HW, HW)   3x3 mean-pool stencil matrix (f32)
    # w_ref: (C, C)     Linear weight, torch (out, in) layout -> no transpose needed
    # b_ref: (C, 1)     Linear bias as a column (lane-broadcast)
    # o_ref: (B, C, HW) projected features, channel-major

    # --- 3x3 mean pool for all batches & channels: one MXU matmul, f32 exact ---
    pooled = jnp.dot(x_ref[...], p_ref[...],
                     preferred_element_type=jnp.float32)            # (B*C, HW)

    # --- fold batch along lanes -> one lane-dense projection matmul ---
    pooled_cat = jnp.concatenate(
        [pooled[b * C:(b + 1) * C, :] for b in range(B)], axis=1)    # (C, B*HW)

    # bf16 MXU inputs, f32 accumulation (v6e/v7x fast path; v5e fine too)
    y = jnp.dot(w_ref[...].astype(jnp.bfloat16),
                pooled_cat.astype(jnp.bfloat16),
                preferred_element_type=jnp.float32) + b_ref[...]     # (C, B*HW)

    for b in range(B):
        o_ref[b] = y[:, b * HW:(b + 1) * HW]                         # (C, HW)


def feature_aggregator(features, w_lin, b_lin, patch_size=3):
    """features: (B, N, C) f32. w_lin: (C, C) torch (out, in). b_lin: (C,)."""
    B, N, C = features.shape
    H = W = int(math.isqrt(N))
    assert H * W == N, "N must be a perfect square"
    assert patch_size % 2 == 1, "odd patch sizes only (module default is 3)"
    HW = H * W

    x2d = features.reshape(B * C, HW)        # free view == torch reshape(B, C, H, W)
    pool_mat = _pool_matrix(H, W, patch_size)
    bias_col = b_lin.reshape(C, 1)

    out = pl.pallas_call(
        functools.partial(_aggr_kernel, B=B, C=C, HW=HW),
        out_shape=jax.ShapeDtypeStruct((B, C, HW), jnp.float32),
        grid=(1,),                            # single step: no per-step pipeline overhead
        in_specs=[
            pl.BlockSpec((B * C, HW), lambda i: (0, 0)),
            pl.BlockSpec((HW, HW), lambda i: (0, 0)),
            pl.BlockSpec((C, C), lambda i: (0, 0)),
            pl.BlockSpec((C, 1), lambda i: (0, 0)),
        ],
        out_specs=pl.BlockSpec((B, C, HW), lambda i: (0, 0, 0)),
        compiler_params=pltpu.CompilerParams(
            dimension_semantics=("arbitrary",),
            vmem_limit_bytes=32 * 1024 * 1024,   # explicit budget (safe on v5e/v6e/v7x)
        ),
    )(x2d, pool_mat, w_lin, bias_col)

    # torch:  reshape(-1,H,W,C) -> permute(0,3,1,2) -> reshape(B,N,C)
    # `out` is already channel-major per batch, so this is a free reshape.
    return out.reshape(B, N, C)


def _reference(features, w_lin, b_lin, patch_size=3):
    """Pure-JAX f32 reference mirroring the PyTorch module exactly."""
    B, N, C = features.shape
    H = W = int(math.isqrt(N))
    pad = (patch_size - 1) // 2
    img = features.reshape(B, C, H, W)
    imgp = jnp.pad(img, ((0, 0), (0, 0), (pad, pad), (pad, pad)))
    acc = jnp.zeros((B, C, H, W), jnp.float32)
    for dh in range(patch_size):
        for dw in range(patch_size):
            acc = acc + imgp[:, :, dh:dh + H, dw:dw + W]
    pooled = acc / float(patch_size * patch_size)                     # (B, C, H, W)
    pooled = jnp.transpose(pooled, (0, 2, 3, 1)).reshape(B * H * W, C)
    y = pooled @ w_lin.T + b_lin                                      # Linear(C, C)
    y = y.reshape(B, H, W, C)
    y = jnp.transpose(y, (0, 3, 1, 2)).reshape(B, N, C)
    return y


if __name__ == "__main__":
    # Small shapes consistent with the module: B=2, N=64 (H=W=8), C=input_dim=128.
    B, H, W, C = 2, 8, 8, 128
    N = H * W

    key = jax.random.PRNGKey(0)
    kx, kw, kb = jax.random.split(key, 3)

    features = jax.random.normal(kx, (B, N, C), dtype=jnp.float32)

    # Projection: single Linear(C, C); weight xavier_normal_, bias ~ U(-1/sqrt(C), 1/sqrt(C)).
    xavier_std = math.sqrt(2.0 / (C + C))
    w_lin = xavier_std * jax.random.normal(kw, (C, C), dtype=jnp.float32)   # (out, in)
    bound = 1.0 / math.sqrt(C)
    b_lin = jax.random.uniform(kb, (C,), dtype=jnp.float32, minval=-bound, maxval=bound)

    agg = jax.jit(feature_aggregator, static_argnames="patch_size")
    out = agg(features, w_lin, b_lin, patch_size=3)
    out = jax.block_until_ready(out)

    ref = jax.block_until_ready(_reference(features, w_lin, b_lin, patch_size=3))
    assert out.shape == (B, N, C), out.shape
    max_err = float(jnp.max(jnp.abs(out - ref)))
    # bf16 MXU inputs (f32 accumulate) -> loosened tolerance vs pure-f32 reference.
    assert jnp.allclose(out, ref, atol=2e-2, rtol=2e-2), max_err

    print("KERNEL_OK")
</pallas_src>

<mosaic_0001>
module attributes {stable_mosaic.version = 11 : i64} {
  func.func @_aggr_kernel(%arg0: i32, %arg1: memref<256x64xf32, #tpu.memory_space<vmem>>, %arg2: memref<64x64xf32, #tpu.memory_space<vmem>>, %arg3: memref<128x128xf32, #tpu.memory_space<vmem>>, %arg4: memref<128x1xf32, #tpu.memory_space<vmem>>, %arg5: memref<2x128x64xf32, #tpu.memory_space<vmem>>) attributes {dimension_semantics = [#tpu.dimension_semantics<arbitrary>], iteration_bounds = array<i64: 1>, scalar_prefetch = 0 : i64, scratch_operands = 0 : i64, tpu.core_type = #tpu.core_type<tc>, window_params = [{pipeline_mode = #tpu.pipeline_mode<synchronous>, transform_indices = @transform_0, window_bounds = array<i64: 256, 64>}, {pipeline_mode = #tpu.pipeline_mode<synchronous>, transform_indices = @transform_1, window_bounds = array<i64: 64, 64>}, {pipeline_mode = #tpu.pipeline_mode<synchronous>, transform_indices = @transform_2, window_bounds = array<i64: 128, 128>}, {pipeline_mode = #tpu.pipeline_mode<synchronous>, transform_indices = @transform_3, window_bounds = array<i64: 128, 1>}, {pipeline_mode = #tpu.pipeline_mode<synchronous>, transform_indices = @transform_4, window_bounds = array<i64: 2, 128, 64>}]} {
    %c0 = arith.constant 0 : index
    %c0_0 = arith.constant 0 : index
    %0 = vector.load %arg1[%c0, %c0_0] : memref<256x64xf32, #tpu.memory_space<vmem>>, vector<256x64xf32>
    %c0_1 = arith.constant 0 : index
    %c0_2 = arith.constant 0 : index
    %1 = vector.load %arg2[%c0_1, %c0_2] : memref<64x64xf32, #tpu.memory_space<vmem>>, vector<64x64xf32>
    %cst = arith.constant dense<0.000000e+00> : vector<256x64xf32>
    %2 = tpu.matmul %0, %1, %cst {dimension_numbers = #tpu.dot_dimension_numbers<[1], [0], [0], [1], [0, 0, 1, 1], [], []>} : vector<256x64xf32>, vector<64x64xf32>, vector<256x64xf32> -> vector<256x64xf32>
    %3 = vector.extract_strided_slice %2 {offsets = [0, 0], sizes = [128, 64], strides = [1, 1]} : vector<256x64xf32> to vector<128x64xf32>
    %4 = vector.extract_strided_slice %2 {offsets = [128, 0], sizes = [128, 64], strides = [1, 1]} : vector<256x64xf32> to vector<128x64xf32>
    %5 = tpu.concatenate %3, %4 in 1 : vector<128x64xf32>, vector<128x64xf32> -> vector<128x128xf32>
    %c0_3 = arith.constant 0 : index
    %c0_4 = arith.constant 0 : index
    %6 = vector.load %arg3[%c0_3, %c0_4] : memref<128x128xf32, #tpu.memory_space<vmem>>, vector<128x128xf32>
    %7 = arith.truncf %6 : vector<128x128xf32> to vector<128x128xbf16>
    %8 = arith.truncf %5 : vector<128x128xf32> to vector<128x128xbf16>
    %cst_5 = arith.constant dense<0.000000e+00> : vector<128x128xf32>
    %9 = tpu.matmul %7, %8, %cst_5 {dimension_numbers = #tpu.dot_dimension_numbers<[1], [0], [0], [1], [0, 0, 1, 1], [], []>} : vector<128x128xbf16>, vector<128x128xbf16>, vector<128x128xf32> -> vector<128x128xf32>
    %c0_6 = arith.constant 0 : index
    %c0_7 = arith.constant 0 : index
    %10 = vector.load %arg4[%c0_6, %c0_7] : memref<128x1xf32, #tpu.memory_space<vmem>>, vector<128x1xf32>
    %11 = vector.broadcast %10 : vector<128x1xf32> to vector<128x128xf32>
    %12 = arith.addf %9, %11 : vector<128x128xf32>
    %13 = vector.extract_strided_slice %12 {offsets = [0, 0], sizes = [128, 64], strides = [1, 1]} : vector<128x128xf32> to vector<128x64xf32>
    %c0_8 = arith.constant 0 : index
    %c0_9 = arith.constant 0 : index
    %c0_10 = arith.constant 0 : index
    %14 = vector.load %arg5[%c0_8, %c0_9, %c0_10] : memref<2x128x64xf32, #tpu.memory_space<vmem>>, vector<1x128x64xf32>
    %15 = vector.shape_cast %14 : vector<1x128x64xf32> to vector<128x64xf32>
    %16 = vector.shape_cast %13 : vector<128x64xf32> to vector<1x128x64xf32>
    tpu.vector_store %arg5[%c0_8, %c0_9, %c0_10], %16 {strides = array<i32>} : memref<2x128x64xf32, #tpu.memory_space<vmem>>, vector<1x128x64xf32>,
    %17 = vector.extract_strided_slice %12 {offsets = [0, 64], sizes = [128, 64], strides = [1, 1]} : vector<128x128xf32> to vector<128x64xf32>
    %c1 = arith.constant 1 : index
    %c0_11 = arith.constant 0 : index
    %c0_12 = arith.constant 0 : index
    %18 = vector.load %arg5[%c1, %c0_11, %c0_12] : memref<2x128x64xf32, #tpu.memory_space<vmem>>, vector<1x128x64xf32>
    %19 = vector.shape_cast %18 : vector<1x128x64xf32> to vector<128x64xf32>
    %20 = vector.shape_cast %17 : vector<128x64xf32> to vector<1x128x64xf32>
    tpu.vector_store %arg5[%c1, %c0_11, %c0_12], %20 {strides = array<i32>} : memref<2x128x64xf32, #tpu.memory_space<vmem>>, vector<1x128x64xf32>,
    return
  }
  func.func @transform_0(%arg0: i32) -> (i32, i32) {
    %c0_i32 = arith.constant 0 : i32
    %c0_i32_0 = arith.constant 0 : i32
    %c0_i32_1 = arith.constant 0 : i32
    return %c0_i32, %c0_i32_0 : i32, i32
  }
  func.func @transform_1(%arg0: i32) -> (i32, i32) {
    %c0_i32 = arith.constant 0 : i32
    %c0_i32_0 = arith.constant 0 : i32
    %c0_i32_1 = arith.constant 0 : i32
    return %c0_i32, %c0_i32_0 : i32, i32
  }
  func.func @transform_2(%arg0: i32) -> (i32, i32) {
    %c0_i32 = arith.constant 0 : i32
    %c0_i32_0 = arith.constant 0 : i32
    %c0_i32_1 = arith.constant 0 : i32
    return %c0_i32, %c0_i32_0 : i32, i32
  }
  func.func @transform_3(%arg0: i32) -> (i32, i32) {
    %c0_i32 = arith.constant 0 : i32
    %c0_i32_0 = arith.constant 0 : i32
    %c0_i32_1 = arith.constant 0 : i32
    return %c0_i32, %c0_i32_0 : i32, i32
  }
  func.func @transform_4(%arg0: i32) -> (i32, i32, i32) {
    %c0_i32 = arith.constant 0 : i32
    %c0_i32_0 = arith.constant 0 : i32
    %c0_i32_1 = arith.constant 0 : i32
    %c0_i32_2 = arith.constant 0 : i32
    return %c0_i32, %c0_i32_0, %c0_i32_1 : i32, i32, i32
  }
}

</mosaic_0001>

<llo_original>
// kernel: feature_aggregator.1
$region0: #{feature_aggregator.1}
  #allocation0 [shape = 'u32[]', space=smem, size = 0x4, offset = 0x4, fixed_abs, tag = 'smem constant byte address 0x4 - core index']
  #allocation1 [shape = 'u32[72,128]{1,0:T(1,128)}', space=vmem, size = 0x9000, scoped, tag = 'internal scratch']
  %s0 = inlined_call_operand.vmem [shape: f32[256,64], index: 0, kind: input, shape index: {}]
  %s1 = inlined_call_operand.vmem [shape: f32[64,64], index: 1, kind: input, shape index: {}]
  %s2 = inlined_call_operand.vmem [shape: f32[128,128], index: 2, kind: input, shape index: {}]
  %s3 = inlined_call_operand.vmem [shape: f32[128,1], index: 3, kind: input, shape index: {}]
  %s4 = inlined_call_operand.vmem [shape: f32[2,128,64], index: 4, kind: output, shape index: {}]
  %s5 = sld [smem:[#allocation0]]
  $region26: #{feature_aggregator.1} parent=0
    _
  %s7 = ssub.s32 1, %s5
  %s8 = scalar_select 0, %s7, %s5
  // Predicated region
  $region2: #{feature_aggregator.1} parent=0 // pred_check
    _
  $region3: #{feature_aggregator.1} parent=0 // pred_check_branch
    %10 = sbr.rel (0) target = $region5
  $region4: #{feature_aggregator.1} parent=0 // pred_region
    _
  $region5: #{feature_aggregator.1} parent=0 // pred_fallthru
    _
  // Predicated region
  $region6: #{feature_aggregator.1} parent=0 // pred_check
    _
  $region7: #{feature_aggregator.1} parent=0 // pred_check_branch
    %12 = sbr.rel (0) target = $region9
  $region8: #{feature_aggregator.1} parent=0 // pred_region
    _
  $region9: #{feature_aggregator.1} parent=0 // pred_fallthru
    _
  // Predicated region
  $region10: #{feature_aggregator.1} parent=0 // pred_check
    _
  $region11: #{feature_aggregator.1} parent=0 // pred_check_branch
    %14 = sbr.rel (0) target = $region13
  $region12: #{feature_aggregator.1} parent=0 // pred_region
    _
  $region13: #{feature_aggregator.1} parent=0 // pred_fallthru
    _
  // Predicated region
  $region14: #{feature_aggregator.1} parent=0 // pred_check
    _
  $region15: #{feature_aggregator.1} parent=0 // pred_check_branch
    %16 = sbr.rel (0) target = $region17
  $region16: #{feature_aggregator.1} parent=0 // pred_region
    _
  $region17: #{feature_aggregator.1} parent=0 // pred_fallthru
    _
  %v17 = vld [vmem:[%s0] sm:$0xff]
  %v18 = vld [vmem:[%s0 + $0x8] sm:$0xff]
  %v19 = vld [vmem:[%s0 + $0x10] sm:$0xff]
  %v20 = vld [vmem:[%s0 + $0x18] sm:$0xff]
  %v21 = vld [vmem:[%s0 + $0x20] sm:$0xff]
  %v22 = vld [vmem:[%s0 + $0x28] sm:$0xff]
  %v23 = vld [vmem:[%s0 + $0x30] sm:$0xff]
  %v24 = vld [vmem:[%s0 + $0x38] sm:$0xff]
  %v25 = vld [vmem:[%s0 + $0x40] sm:$0xff]
  %v26 = vld [vmem:[%s0 + $0x48] sm:$0xff]
  %v27 = vld [vmem:[%s0 + $0x50] sm:$0xff]
  %v28 = vld [vmem:[%s0 + $0x58] sm:$0xff]
  %v29 = vld [vmem:[%s0 + $0x60] sm:$0xff]
  %v30 = vld [vmem:[%s0 + $0x68] sm:$0xff]
  %v31 = vld [vmem:[%s0 + $0x70] sm:$0xff]
  %v32 = vld [vmem:[%s0 + $0x78] sm:$0xff]
  %v33 = vld [vmem:[%s0 + $0x80] sm:$0xff]
  %v34 = vld [vmem:[%s0 + $0x88] sm:$0xff]
  %v35 = vld [vmem:[%s0 + $0x90] sm:$0xff]
  %v36 = vld [vmem:[%s0 + $0x98] sm:$0xff]
  %v37 = vld [vmem:[%s0 + $0xa0] sm:$0xff]
  %v38 = vld [vmem:[%s0 + $0xa8] sm:$0xff]
  %v39 = vld [vmem:[%s0 + $0xb0] sm:$0xff]
  %v40 = vld [vmem:[%s0 + $0xb8] sm:$0xff]
  %v41 = vld [vmem:[%s0 + $0xc0] sm:$0xff]
  %v42 = vld [vmem:[%s0 + $0xc8] sm:$0xff]
  %v43 = vld [vmem:[%s0 + $0xd0] sm:$0xff]
  %v44 = vld [vmem:[%s0 + $0xd8] sm:$0xff]
  %v45 = vld [vmem:[%s0 + $0xe0] sm:$0xff]
  %v46 = vld [vmem:[%s0 + $0xe8] sm:$0xff]
  %v47 = vld [vmem:[%s0 + $0xf0] sm:$0xff]
  %v48 = vld [vmem:[%s0 + $0xf8] sm:$0xff]
  %v49 = vld [vmem:[%s1] sm:$0xff]
  %v50 = vld [vmem:[%s1 + $0x8] sm:$0xff]
  %v51 = vld [vmem:[%s1 + $0x10] sm:$0xff]
  %v52 = vld [vmem:[%s1 + $0x18] sm:$0xff]
  %v53 = vld [vmem:[%s1 + $0x20] sm:$0xff]
  %v54 = vld [vmem:[%s1 + $0x28] sm:$0xff]
  %v55 = vld [vmem:[%s1 + $0x30] sm:$0xff]
  %v56 = vld [vmem:[%s1 + $0x38] sm:$0xff]
  %vm57 = vcmask 523264
  %v59 = vsel %vm57, %v17, 0
  %v62 = vsel %vm57, %v18, 0
  %v65 = vsel %vm57, %v19, 0
  %v68 = vsel %vm57, %v20, 0
  %v71 = vsel %vm57, %v21, 0
  %v74 = vsel %vm57, %v22, 0
  %v77 = vsel %vm57, %v23, 0
  %v80 = vsel %vm57, %v24, 0
  %v83 = vsel %vm57, %v25, 0
  %v86 = vsel %vm57, %v26, 0
  %v89 = vsel %vm57, %v27, 0
  %v92 = vsel %vm57, %v28, 0
  %v95 = vsel %vm57, %v29, 0
  %v98 = vsel %vm57, %v30, 0
  %v101 = vsel %vm57, %v31, 0
  %v104 = vsel %vm57, %v32, 0
  %v107 = vsel %vm57, %v33, 0
  %v110 = vsel %vm57, %v34, 0
  %v113 = vsel %vm57, %v35, 0
  %v116 = vsel %vm57, %v36, 0
  %v119 = vsel %vm57, %v37, 0
  %v122 = vsel %vm57, %v38, 0
  %v125 = vsel %vm57, %v39, 0
  %v128 = vsel %vm57, %v40, 0
  %v131 = vsel %vm57, %v41, 0
  %v134 = vsel %vm57, %v42, 0
  %v137 = vsel %vm57, %v43, 0
  %v140 = vsel %vm57, %v44, 0
  %v143 = vsel %vm57, %v45, 0
  %v146 = vsel %vm57, %v46, 0
  %v149 = vsel %vm57, %v47, 0
  %v152 = vsel %vm57, %v48, 0
  %154 = vmatpush.msra.mxu0 0.0
  %155 = vmatpush.msra.mxu0 0.0
  %156 = vmatpush.msra.mxu0 0.0
  %157 = vmatpush.msra.mxu0 0.0
  %158 = vmatpush.msra.mxu0 0.0
  %159 = vmatpush.msra.mxu0 0.0
  %160 = vmatpush.msra.mxu0 0.0
  %161 = vmatpush.msra.mxu0 0.0
  %162 = vmatpush.msra.mxu0 %v56
  %163 = vmatpush.msra.mxu0 %v55
  %164 = vmatpush.msra.mxu0 %v54
  %165 = vmatpush.msra.mxu0 %v53
  %166 = vmatpush.msra.mxu0 %v52
  %167 = vmatpush.msra.mxu0 %v51
  %168 = vmatpush.msra.mxu0 %v50
  %169 = vmatpush.msra.mxu0 %v49
  %170 = vmatmul.f32.gmra.mxu0 %v59
  %v171 = vpop.f32.mrf.mxu0
  %v172 = vadd.f32 0.0, %v171
  %173 = vmatmul.f32.gmra.mxu0 %v62
  %v174 = vpop.f32.mrf.mxu0
  %v175 = vadd.f32 0.0, %v174
  %176 = vmatmul.f32.gmra.mxu0 %v65
  %v177 = vpop.f32.mrf.mxu0
  %v178 = vadd.f32 0.0, %v177
  %179 = vmatmul.f32.gmra.mxu0 %v68
  %v180 = vpop.f32.mrf.mxu0
  %v181 = vadd.f32 0.0, %v180
  %182 = vmatmul.f32.gmra.mxu0 %v71
  %v183 = vpop.f32.mrf.mxu0
  %v184 = vadd.f32 0.0, %v183
  %185 = vmatmul.f32.gmra.mxu0 %v74
  %v186 = vpop.f32.mrf.mxu0
  %v187 = vadd.f32 0.0, %v186
  %188 = vmatmul.f32.gmra.mxu0 %v77
  %v189 = vpop.f32.mrf.mxu0
  %v190 = vadd.f32 0.0, %v189
  %191 = vmatmul.f32.gmra.mxu0 %v80
  %v192 = vpop.f32.mrf.mxu0
  %v193 = vadd.f32 0.0, %v192
  %194 = vmatmul.f32.gmra.mxu0 %v83
  %v195 = vpop.f32.mrf.mxu0
  %v196 = vadd.f32 0.0, %v195
  %197 = vmatmul.f32.gmra.mxu0 %v86
  %v198 = vpop.f32.mrf.mxu0
  %v199 = vadd.f32 0.0, %v198
  %200 = vmatmul.f32.gmra.mxu0 %v89
  %v201 = vpop.f32.mrf.mxu0
  %v202 = vadd.f32 0.0, %v201
  %203 = vmatmul.f32.gmra.mxu0 %v92
  %v204 = vpop.f32.mrf.mxu0
  %v205 = vadd.f32 0.0, %v204
  %206 = vmatmul.f32.gmra.mxu0 %v95
  %v207 = vpop.f32.mrf.mxu0
  %v208 = vadd.f32 0.0, %v207
  %209 = vmatmul.f32.gmra.mxu0 %v98
  %v210 = vpop.f32.mrf.mxu0
  %v211 = vadd.f32 0.0, %v210
  %212 = vmatmul.f32.gmra.mxu0 %v101
  %v213 = vpop.f32.mrf.mxu0
  %v214 = vadd.f32 0.0, %v213
  %215 = vmatmul.f32.gmra.mxu0 %v104
  %v216 = vpop.f32.mrf.mxu0
  %v217 = vadd.f32 0.0, %v216
  %218 = vmatmul.f32.gmra.mxu0 %v107
  %v219 = vpop.f32.mrf.mxu0
  %v220 = vadd.f32 0.0, %v219
  %221 = vmatmul.f32.gmra.mxu0 %v110
  %v222 = vpop.f32.mrf.mxu0
  %v223 = vadd.f32 0.0, %v222
  %224 = vmatmul.f32.gmra.mxu0 %v113
  %v225 = vpop.f32.mrf.mxu0
  %v226 = vadd.f32 0.0, %v225
  %227 = vmatmul.f32.gmra.mxu0 %v116
  %v228 = vpop.f32.mrf.mxu0
  %v229 = vadd.f32 0.0, %v228
  %230 = vmatmul.f32.gmra.mxu0 %v119
  %v231 = vpop.f32.mrf.mxu0
  %v232 = vadd.f32 0.0, %v231
  %233 = vmatmul.f32.gmra.mxu0 %v122
  %v234 = vpop.f32.mrf.mxu0
  %v235 = vadd.f32 0.0, %v234
  %236 = vmatmul.f32.gmra.mxu0 %v125
  %v237 = vpop.f32.mrf.mxu0
  %v238 = vadd.f32 0.0, %v237
  %239 = vmatmul.f32.gmra.mxu0 %v128
  %v240 = vpop.f32.mrf.mxu0
  %v241 = vadd.f32 0.0, %v240
  %242 = vmatmul.f32.gmra.mxu0 %v131
  %v243 = vpop.f32.mrf.mxu0
  %v244 = vadd.f32 0.0, %v243
  %245 = vmatmul.f32.gmra.mxu0 %v134
  %v246 = vpop.f32.mrf.mxu0
  %v247 = vadd.f32 0.0, %v246
  %248 = vmatmul.f32.gmra.mxu0 %v137
  %v249 = vpop.f32.mrf.mxu0
  %v250 = vadd.f32 0.0, %v249
  %251 = vmatmul.f32.gmra.mxu0 %v140
  %v252 = vpop.f32.mrf.mxu0
  %v253 = vadd.f32 0.0, %v252
  %254 = vmatmul.f32.gmra.mxu0 %v143
  %v255 = vpop.f32.mrf.mxu0
  %v256 = vadd.f32 0.0, %v255
  %257 = vmatmul.f32.gmra.mxu0 %v146
  %v258 = vpop.f32.mrf.mxu0
  %v259 = vadd.f32 0.0, %v258
  %260 = vmatmul.f32.gmra.mxu0 %v149
  %v261 = vpop.f32.mrf.mxu0
  %v262 = vadd.f32 0.0, %v261
  %263 = vmatmul.f32.gmra.mxu0 %v152
  %v264 = vpop.f32.mrf.mxu0
  %v265 = vadd.f32 0.0, %v264
  %266 = vdwg.mxu0
  %283 = vrot.lane.b32.xlu0 %v220, 64
  %v284 = vpop.permute.xlu0 %283
  %285 = vrot.lane.b32.xlu0 %v223, 64
  %v286 = vpop.permute.xlu0 %285
  %287 = vrot.lane.b32.xlu0 %v226, 64
  %v288 = vpop.permute.xlu0 %287
  %289 = vrot.lane.b32.xlu0 %v229, 64
  %v290 = vpop.permute.xlu0 %289
  %291 = vrot.lane.b32.xlu0 %v232, 64
  %v292 = vpop.permute.xlu0 %291
  %293 = vrot.lane.b32.xlu0 %v235, 64
  %v294 = vpop.permute.xlu0 %293
  %295 = vrot.lane.b32.xlu0 %v238, 64
  %v296 = vpop.permute.xlu0 %295
  %297 = vrot.lane.b32.xlu0 %v241, 64
  %v298 = vpop.permute.xlu0 %297
  %299 = vrot.lane.b32.xlu0 %v244, 64
  %v300 = vpop.permute.xlu0 %299
  %301 = vrot.lane.b32.xlu0 %v247, 64
  %v302 = vpop.permute.xlu0 %301
  %303 = vrot.lane.b32.xlu0 %v250, 64
  %v304 = vpop.permute.xlu0 %303
  %305 = vrot.lane.b32.xlu0 %v253, 64
  %v306 = vpop.permute.xlu0 %305
  %307 = vrot.lane.b32.xlu0 %v256, 64
  %v308 = vpop.permute.xlu0 %307
  %309 = vrot.lane.b32.xlu0 %v259, 64
  %v310 = vpop.permute.xlu0 %309
  %311 = vrot.lane.b32.xlu0 %v262, 64
  %v312 = vpop.permute.xlu0 %311
  %313 = vrot.lane.b32.xlu0 %v265, 64
  %v314 = vpop.permute.xlu0 %313
  %v331 = vsel %vm57, %v172, %v284
  %v332 = vsel %vm57, %v175, %v286
  %v333 = vsel %vm57, %v178, %v288
  %v334 = vsel %vm57, %v181, %v290
  %v335 = vsel %vm57, %v184, %v292
  %v336 = vsel %vm57, %v187, %v294
  %v337 = vsel %vm57, %v190, %v296
  %v338 = vsel %vm57, %v193, %v298
  %v339 = vsel %vm57, %v196, %v300
  %v340 = vsel %vm57, %v199, %v302
  %v341 = vsel %vm57, %v202, %v304
  %v342 = vsel %vm57, %v205, %v306
  %v343 = vsel %vm57, %v208, %v308
  %v344 = vsel %vm57, %v211, %v310
  %v345 = vsel %vm57, %v214, %v312
  %v346 = vsel %vm57, %v217, %v314
  %v347 = vld [vmem:[%s2] sm:$0xff]
  %v348 = vld [vmem:[%s2 + $0x8] sm:$0xff]
  %v349 = vld [vmem:[%s2 + $0x10] sm:$0xff]
  %v350 = vld [vmem:[%s2 + $0x18] sm:$0xff]
  %v351 = vld [vmem:[%s2 + $0x20] sm:$0xff]
  %v352 = vld [vmem:[%s2 + $0x28] sm:$0xff]
  %v353 = vld [vmem:[%s2 + $0x30] sm:$0xff]
  %v354 = vld [vmem:[%s2 + $0x38] sm:$0xff]
  %v355 = vld [vmem:[%s2 + $0x40] sm:$0xff]
  %v356 = vld [vmem:[%s2 + $0x48] sm:$0xff]
  %v357 = vld [vmem:[%s2 + $0x50] sm:$0xff]
  %v358 = vld [vmem:[%s2 + $0x58] sm:$0xff]
  %v359 = vld [vmem:[%s2 + $0x60] sm:$0xff]
  %v360 = vld [vmem:[%s2 + $0x68] sm:$0xff]
  %v361 = vld [vmem:[%s2 + $0x70] sm:$0xff]
  %v362 = vld [vmem:[%s2 + $0x78] sm:$0xff]
  %v363 = vpack.c.bf16 %v348, %v347
  %v364 = vpack.c.bf16 %v350, %v349
  %v365 = vpack.c.bf16 %v352, %v351
  %v366 = vpack.c.bf16 %v354, %v353
  %v367 = vpack.c.bf16 %v356, %v355
  %v368 = vpack.c.bf16 %v358, %v357
  %v369 = vpack.c.bf16 %v360, %v359
  %v370 = vpack.c.bf16 %v362, %v361
  %v371 = vpack.c.bf16 %v332, %v331
  %v372 = vpack.c.bf16 %v334, %v333
  %v373 = vpack.c.bf16 %v336, %v335
  %v374 = vpack.c.bf16 %v338, %v337
  %v375 = vpack.c.bf16 %v340, %v339
  %v376 = vpack.c.bf16 %v342, %v341
  %v377 = vpack.c.bf16 %v344, %v343
  %v378 = vpack.c.bf16 %v346, %v345
  %v379 = vld [vmem:[%s3] sm:$0xff]
  %v380 = vld [vmem:[%s3 + $0x8] sm:$0xff]
  %v381 = vld [vmem:[%s3 + $0x10] sm:$0xff]
  %v382 = vld [vmem:[%s3 + $0x18] sm:$0xff]
  %v383 = vld [vmem:[%s3 + $0x20] sm:$0xff]
  %v384 = vld [vmem:[%s3 + $0x28] sm:$0xff]
  %v385 = vld [vmem:[%s3 + $0x30] sm:$0xff]
  %v386 = vld [vmem:[%s3 + $0x38] sm:$0xff]
  %v387 = vld [vmem:[%s3 + $0x40] sm:$0xff]
  %v388 = vld [vmem:[%s3 + $0x48] sm:$0xff]
  %v389 = vld [vmem:[%s3 + $0x50] sm:$0xff]
  %v390 = vld [vmem:[%s3 + $0x58] sm:$0xff]
  %v391 = vld [vmem:[%s3 + $0x60] sm:$0xff]
  %v392 = vld [vmem:[%s3 + $0x68] sm:$0xff]
  %v393 = vld [vmem:[%s3 + $0x70] sm:$0xff]
  %v394 = vld [vmem:[%s3 + $0x78] sm:$0xff]
  %396 = vset.pattern.permute.xlu0 0
  %397 = vperm.xlu0 %396, %v379
  %v398 = vpop.permute.xlu0 %397
  %401 = vset.pattern.permute.xlu0 0
  %402 = vperm.xlu0 %401, %v380
  %v403 = vpop.permute.xlu0 %402
  %406 = vset.pattern.permute.xlu0 0
  %407 = vperm.xlu0 %406, %v381
  %v408 = vpop.permute.xlu0 %407
  %411 = vset.pattern.permute.xlu0 0
  %412 = vperm.xlu0 %411, %v382
  %v413 = vpop.permute.xlu0 %412
  %416 = vset.pattern.permute.xlu0 0
  %417 = vperm.xlu0 %416, %v383
  %v418 = vpop.permute.xlu0 %417
  %421 = vset.pattern.permute.xlu0 0
  %422 = vperm.xlu0 %421, %v384
  %v423 = vpop.permute.xlu0 %422
  %426 = vset.pattern.permute.xlu0 0
  %427 = vperm.xlu0 %426, %v385
  %v428 = vpop.permute.xlu0 %427
  %431 = vset.pattern.permute.xlu0 0
  %432 = vperm.xlu0 %431, %v386
  %v433 = vpop.permute.xlu0 %432
  %436 = vset.pattern.permute.xlu0 0
  %437 = vperm.xlu0 %436, %v387
  %v438 = vpop.permute.xlu0 %437
  %441 = vset.pattern.permute.xlu0 0
  %442 = vperm.xlu0 %441, %v388
  %v443 = vpop.permute.xlu0 %442
  %446 = vset.pattern.permute.xlu0 0
  %447 = vperm.xlu0 %446, %v389
  %v448 = vpop.permute.xlu0 %447
  %451 = vset.pattern.permute.xlu0 0
  %452 = vperm.xlu0 %451, %v390
  %v453 = vpop.permute.xlu0 %452
  %456 = vset.pattern.permute.xlu0 0
  %457 = vperm.xlu0 %456, %v391
  %v458 = vpop.permute.xlu0 %457
  %461 = vset.pattern.permute.xlu0 0
  %462 = vperm.xlu0 %461, %v392
  %v463 = vpop.permute.xlu0 %462
  %466 = vset.pattern.permute.xlu0 0
  %467 = vperm.xlu0 %466, %v393
  %v468 = vpop.permute.xlu0 %467
  %471 = vset.pattern.permute.xlu0 0
  %472 = vperm.xlu0 %471, %v394
  %v473 = vpop.permute.xlu0 %472
  %475 = vmatpush.bf16.msra.mxu0 %v378
  %476 = vmatpush.bf16.msra.mxu0 %v377
  %477 = vmatpush.bf16.msra.mxu0 %v376
  %478 = vmatpush.bf16.msra.mxu0 %v375
  %479 = vmatpush.bf16.msra.mxu0 %v374
  %480 = vmatpush.bf16.msra.mxu0 %v373
  %481 = vmatpush.bf16.msra.mxu0 %v372
  %482 = vmatpush.bf16.msra.mxu0 %v371
  %483 = vmatmul.bf16.gmra.mxu0 %v363
  %v484 = vpop.f32.mrf.mxu0
  %v485 = vadd.f32 %v398, %v484
  %v486 = vpop.f32.mrf.mxu0
  %v487 = vadd.f32 %v403, %v486
  %488 = vmatmul.bf16.gmra.mxu0 %v364
  %v489 = vpop.f32.mrf.mxu0
  %v490 = vadd.f32 %v408, %v489
  %v491 = vpop.f32.mrf.mxu0
  %v492 = vadd.f32 %v413, %v491
  %493 = vmatmul.bf16.gmra.mxu0 %v365
  %v494 = vpop.f32.mrf.mxu0
  %v495 = vadd.f32 %v418, %v494
  %v496 = vpop.f32.mrf.mxu0
  %v497 = vadd.f32 %v423, %v496
  %498 = vmatmul.bf16.gmra.mxu0 %v366
  %v499 = vpop.f32.mrf.mxu0
  %v500 = vadd.f32 %v428, %v499
  %v501 = vpop.f32.mrf.mxu0
  %v502 = vadd.f32 %v433, %v501
  %503 = vmatmul.bf16.gmra.mxu0 %v367
  %v504 = vpop.f32.mrf.mxu0
  %v505 = vadd.f32 %v438, %v504
  %v506 = vpop.f32.mrf.mxu0
  %v507 = vadd.f32 %v443, %v506
  %508 = vmatmul.bf16.gmra.mxu0 %v368
  %v509 = vpop.f32.mrf.mxu0
  %v510 = vadd.f32 %v448, %v509
  %v511 = vpop.f32.mrf.mxu0
  %v512 = vadd.f32 %v453, %v511
  %513 = vmatmul.bf16.gmra.mxu0 %v369
  %v514 = vpop.f32.mrf.mxu0
  %v515 = vadd.f32 %v458, %v514
  %v516 = vpop.f32.mrf.mxu0
  %v517 = vadd.f32 %v463, %v516
  %518 = vmatmul.bf16.gmra.mxu0 %v370
  %v519 = vpop.f32.mrf.mxu0
  %v520 = vadd.f32 %v468, %v519
  %v521 = vpop.f32.mrf.mxu0
  %v522 = vadd.f32 %v473, %v521
  %523 = vdwg.mxu0
  %524 = vst.msk [vmem:[%s4] sm:$0xff] %vm57, %v485
  %525 = vst.msk [vmem:[%s4 + $0x8] sm:$0xff] %vm57, %v487
  %526 = vst.msk [vmem:[%s4 + $0x10] sm:$0xff] %vm57, %v490
  %527 = vst.msk [vmem:[%s4 + $0x18] sm:$0xff] %vm57, %v492
  %528 = vst.msk [vmem:[%s4 + $0x20] sm:$0xff] %vm57, %v495
  %529 = vst.msk [vmem:[%s4 + $0x28] sm:$0xff] %vm57, %v497
  %530 = vst.msk [vmem:[%s4 + $0x30] sm:$0xff] %vm57, %v500
  %531 = vst.msk [vmem:[%s4 + $0x38] sm:$0xff] %vm57, %v502
  %532 = vst.msk [vmem:[%s4 + $0x40] sm:$0xff] %vm57, %v505
  %533 = vst.msk [vmem:[%s4 + $0x48] sm:$0xff] %vm57, %v507
  %534 = vst.msk [vmem:[%s4 + $0x50] sm:$0xff] %vm57, %v510
  %535 = vst.msk [vmem:[%s4 + $0x58] sm:$0xff] %vm57, %v512
  %536 = vst.msk [vmem:[%s4 + $0x60] sm:$0xff] %vm57, %v515
  %537 = vst.msk [vmem:[%s4 + $0x68] sm:$0xff] %vm57, %v517
  %538 = vst.msk [vmem:[%s4 + $0x70] sm:$0xff] %vm57, %v520
  %539 = vst.msk [vmem:[%s4 + $0x78] sm:$0xff] %vm57, %v522
  %556 = vrot.lane.b32.xlu0 %v485, 64
  %v557 = vpop.permute.xlu0 %556
  %558 = vrot.lane.b32.xlu0 %v487, 64
  %v559 = vpop.permute.xlu0 %558
  %560 = vrot.lane.b32.xlu0 %v490, 64
  %v561 = vpop.permute.xlu0 %560
  %562 = vrot.lane.b32.xlu0 %v492, 64
  %v563 = vpop.permute.xlu0 %562
  %564 = vrot.lane.b32.xlu0 %v495, 64
  %v565 = vpop.permute.xlu0 %564
  %566 = vrot.lane.b32.xlu0 %v497, 64
  %v567 = vpop.permute.xlu0 %566
  %568 = vrot.lane.b32.xlu0 %v500, 64
  %v569 = vpop.permute.xlu0 %568
  %570 = vrot.lane.b32.xlu0 %v502, 64
  %v571 = vpop.permute.xlu0 %570
  %572 = vrot.lane.b32.xlu0 %v505, 64
  %v573 = vpop.permute.xlu0 %572
  %574 = vrot.lane.b32.xlu0 %v507, 64
  %v575 = vpop.permute.xlu0 %574
  %576 = vrot.lane.b32.xlu0 %v510, 64
  %v577 = vpop.permute.xlu0 %576
  %578 = vrot.lane.b32.xlu0 %v512, 64
  %v579 = vpop.permute.xlu0 %578
  %580 = vrot.lane.b32.xlu0 %v515, 64
  %v581 = vpop.permute.xlu0 %580
  %582 = vrot.lane.b32.xlu0 %v517, 64
  %v583 = vpop.permute.xlu0 %582
  %584 = vrot.lane.b32.xlu0 %v520, 64
  %v585 = vpop.permute.xlu0 %584
  %586 = vrot.lane.b32.xlu0 %v522, 64
  %v587 = vpop.permute.xlu0 %586
  %s604 = scalar_lea.vmem %s4, 128
  %605 = vst.msk [vmem:[%s604] sm:$0xff] %vm57, %v557
  %606 = vst.msk [vmem:[%s604 + $0x8] sm:$0xff] %vm57, %v559
  %607 = vst.msk [vmem:[%s604 + $0x10] sm:$0xff] %vm57, %v561
  %608 = vst.msk [vmem:[%s604 + $0x18] sm:$0xff] %vm57, %v563
  %609 = vst.msk [vmem:[%s604 + $0x20] sm:$0xff] %vm57, %v565
  %610 = vst.msk [vmem:[%s604 + $0x28] sm:$0xff] %vm57, %v567
  %611 = vst.msk [vmem:[%s604 + $0x30] sm:$0xff] %vm57, %v569
  %612 = vst.msk [vmem:[%s604 + $0x38] sm:$0xff] %vm57, %v571
  %613 = vst.msk [vmem:[%s604 + $0x40] sm:$0xff] %vm57, %v573
  %614 = vst.msk [vmem:[%s604 + $0x48] sm:$0xff] %vm57, %v575
  %615 = vst.msk [vmem:[%s604 + $0x50] sm:$0xff] %vm57, %v577
  %616 = vst.msk [vmem:[%s604 + $0x58] sm:$0xff] %vm57, %v579
  %617 = vst.msk [vmem:[%s604 + $0x60] sm:$0xff] %vm57, %v581
  %618 = vst.msk [vmem:[%s604 + $0x68] sm:$0xff] %vm57, %v583
  %619 = vst.msk [vmem:[%s604 + $0x70] sm:$0xff] %vm57, %v585
  %620 = vst.msk [vmem:[%s604 + $0x78] sm:$0xff] %vm57, %v587
  // Predicated region
  $region18: #{feature_aggregator.1} parent=0 // pred_check
    _
  $region19: #{feature_aggregator.1} parent=0 // pred_check_branch
    %622 = sbr.rel (0) target = $region21
  $region20: #{feature_aggregator.1} parent=0 // pred_region
    _
  $region21: #{feature_aggregator.1} parent=0 // pred_fallthru
    _
  // Predicated region
  $region22: #{feature_aggregator.1} parent=0 // pred_check
    _
  $region23: #{feature_aggregator.1} parent=0 // pred_check_branch
    %624 = sbr.rel (0) target = $region25
  $region24: #{feature_aggregator.1} parent=0 // pred_region
    _
  $region25: #{feature_aggregator.1} parent=0 // pred_fallthru
    _

</llo_original>
